<compile_context>
chip_gen: v7x
topology: tpu7x:2x2x1
jax: 0.10.0
libtpu: 0.0.40
codegen_flags: <defaults>
</compile_context>

<pallas_src>
import math
from functools import partial

import jax
import jax.numpy as jnp
from jax.experimental import pallas as pl
from jax.experimental.pallas import tpu as pltpu


VMEM_LIMIT = 32 * 1024 * 1024


# ----------------------------- in-kernel helpers -----------------------------

def _erf_approx(x):
    # Abramowitz-Stegun 7.1.26 (|err| < 1.5e-7): matches PyTorch exact (erf) GELU.
    a1, a2, a3, a4, a5 = 0.254829592, -0.284496736, 1.421413741, -1.453152027, 1.061405429
    p = 0.3275911
    ax = jnp.abs(x)
    t = 1.0 / (1.0 + p * ax)
    poly = ((((a5 * t + a4) * t + a3) * t + a2) * t + a1) * t
    y = 1.0 - poly * jnp.exp(-ax * ax)
    return jnp.where(x >= 0, y, -y)


def _gelu_exact(x):
    return 0.5 * x * (1.0 + _erf_approx(x * (1.0 / math.sqrt(2.0))))


def _layernorm(x, g, b, eps=1e-5):
    mu = jnp.mean(x, axis=-1, keepdims=True)
    var = jnp.mean((x - mu) ** 2, axis=-1, keepdims=True)
    return (x - mu) * jax.lax.rsqrt(var + eps) * g + b


# --------------------------------- kernels -----------------------------------

def _ln_qkv_kernel(x_ref, g_ref, b_ref, w_ref, o_ref):
    # x_ref: (tm, C) f32 rows; w_ref: (C, 3C) bf16.  Output qkv rows in bf16.
    xn = _layernorm(x_ref[...], g_ref[...], b_ref[...])
    o_ref[...] = jnp.dot(xn.astype(jnp.bfloat16), w_ref[...],
                         preferred_element_type=jnp.float32).astype(jnp.bfloat16)


def _attn_mlp_core(x, q, k, v, mask, wproj, bproj, ln2g, ln2b, w1, b1, w2, b2, *, scale):
    # x: (N, C) f32 ; q/k/v: (H, N, D) bf16 ; mask: (N, N) f32 or None
    # logits for all heads in one batched MXU einsum, f32 accumulation
    s = jnp.einsum('hqd,hkd->hqk', q, k,
                   preferred_element_type=jnp.float32) * scale          # (H, N, N)
    if mask is not None:
        s = s + mask[None, :, :]                                        # broadcast heads

    # softmax (f32) with EUP approximate reciprocal
    s = s - jnp.max(s, axis=-1, keepdims=True)
    e = jnp.exp(s)
    p = e * pl.reciprocal(jnp.sum(e, axis=-1, keepdims=True), approx=True)

    o = jnp.einsum('hqk,hkd->hqd', p.astype(jnp.bfloat16), v,
                   preferred_element_type=jnp.float32)                  # (H, N, D)

    # output projection without transposing heads back: per-head (D, C) weights,
    # batched matmul then sum over the head (leading, untiled) axis.
    per_head = jnp.einsum('hnd,hdc->hnc', o.astype(jnp.bfloat16), wproj,
                          preferred_element_type=jnp.float32)           # (H, N, C)
    attn_out = jnp.sum(per_head, axis=0) + bproj                        # (N, C)

    x1 = x + attn_out

    xn2 = _layernorm(x1, ln2g, ln2b)
    h1 = jnp.dot(xn2.astype(jnp.bfloat16), w1,
                 preferred_element_type=jnp.float32) + b1
    h1 = _gelu_exact(h1)
    h2 = jnp.dot(h1.astype(jnp.bfloat16), w2,
                 preferred_element_type=jnp.float32) + b2
    return x1 + h2


def _attn_mlp_kernel(x_ref, q_ref, k_ref, v_ref, m_ref, wp_ref, bp_ref,
                     g2_ref, be2_ref, w1_ref, b1_ref, w2_ref, b2_ref, o_ref, *, scale):
    o_ref[0] = _attn_mlp_core(
        x_ref[0], q_ref[0], k_ref[0], v_ref[0], m_ref[0],
        wp_ref[...], bp_ref[...], g2_ref[...], be2_ref[...],
        w1_ref[...], b1_ref[...], w2_ref[...], b2_ref[...], scale=scale)


def _attn_mlp_kernel_nomask(x_ref, q_ref, k_ref, v_ref, wp_ref, bp_ref,
                            g2_ref, be2_ref, w1_ref, b1_ref, w2_ref, b2_ref, o_ref, *, scale):
    o_ref[0] = _attn_mlp_core(
        x_ref[0], q_ref[0], k_ref[0], v_ref[0], None,
        wp_ref[...], bp_ref[...], g2_ref[...], be2_ref[...],
        w1_ref[...], b1_ref[...], w2_ref[...], b2_ref[...], scale=scale)


# ------------------------------ forward wrapper -------------------------------

def block_forward(params, x, mask, num_heads):
    B, N, C = x.shape
    assert C % num_heads == 0
    H = num_heads
    D = C // H
    Hm = params["w1"].shape[1]
    scale = D ** (-0.5)
    M = B * N
    tm = 128 if M % 128 == 0 else M        # row tile for the LN+QKV kernel

    # bf16 weights (f32 accumulation in-kernel); proj weight pre-split per head.
    wqkv = params["wqkv"].astype(jnp.bfloat16)                 # (C, 3C)
    wproj = params["wproj"].reshape(H, D, C).astype(jnp.bfloat16)
    w1 = params["w1"].astype(jnp.bfloat16)
    w2 = params["w2"].astype(jnp.bfloat16)

    cp = pltpu.CompilerParams(dimension_semantics=("parallel",),
                              vmem_limit_bytes=VMEM_LIMIT)

    # ---- kernel 1: LayerNorm1 + QKV projection (row tiled, lane-dense output) ----
    qkv = pl.pallas_call(
        _ln_qkv_kernel,
        out_shape=jax.ShapeDtypeStruct((M, 3 * C), jnp.bfloat16),
        grid=(M // tm,),
        in_specs=[pl.BlockSpec((tm, C), lambda i: (i, 0)),
                  pl.BlockSpec((1, C), lambda i: (0, 0)),
                  pl.BlockSpec((1, C), lambda i: (0, 0)),
                  pl.BlockSpec((C, 3 * C), lambda i: (0, 0))],
        out_specs=pl.BlockSpec((tm, 3 * C), lambda i: (i, 0)),
        compiler_params=cp,
    )(x.reshape(M, C), params["ln1_g"], params["ln1_b"], wqkv)

    # ---- layout plumbing (XLA): heads-major q/k/v, no in-kernel transposes ----
    qkv = qkv.reshape(B, N, 3, H, D)
    q = jnp.transpose(qkv[:, :, 0], (0, 2, 1, 3))              # (B, H, N, D) bf16
    k = jnp.transpose(qkv[:, :, 1], (0, 2, 1, 3))
    v = jnp.transpose(qkv[:, :, 2], (0, 2, 1, 3))

    def wfull(shape):
        zeros = (0,) * len(shape)
        return pl.BlockSpec(shape, lambda b: zeros)

    in_specs = [
        pl.BlockSpec((1, N, C), lambda b: (b, 0, 0)),          # x (residual input)
        pl.BlockSpec((1, H, N, D), lambda b: (b, 0, 0, 0)),    # q
        pl.BlockSpec((1, H, N, D), lambda b: (b, 0, 0, 0)),    # k
        pl.BlockSpec((1, H, N, D), lambda b: (b, 0, 0, 0)),    # v
    ]
    inputs = [x, q, k, v]
    if mask is not None:
        in_specs.append(pl.BlockSpec((1, N, N), lambda b: (b, 0, 0)))
        inputs.append(mask)
        kern = partial(_attn_mlp_kernel, scale=scale)
    else:
        kern = partial(_attn_mlp_kernel_nomask, scale=scale)

    in_specs += [
        wfull((H, D, C)), wfull((1, C)),                       # proj weight / bias
        wfull((1, C)), wfull((1, C)),                          # ln2 gamma / beta
        wfull((C, Hm)), wfull((1, Hm)),                        # fc1
        wfull((Hm, C)), wfull((1, C)),                         # fc2
    ]
    inputs += [wproj, params["bproj"], params["ln2_g"], params["ln2_b"],
               w1, params["b1"], w2, params["b2"]]

    # ---- kernel 2: fused attention + proj + residual + LN2 + MLP + residual ----
    out = pl.pallas_call(
        kern,
        out_shape=jax.ShapeDtypeStruct((B, N, C), jnp.float32),
        grid=(B,),
        in_specs=in_specs,
        out_specs=pl.BlockSpec((1, N, C), lambda b: (b, 0, 0)),
        compiler_params=cp,
    )(*inputs)
    return out


# ------------------------------ params & reference ----------------------------

def _xavier_uniform_t(key, fin, fout):
    bound = math.sqrt(6.0 / (fin + fout))
    return jax.random.uniform(key, (fin, fout), jnp.float32, -bound, bound)


def init_params(key, dim, mlp_ratio):
    Hm = int(dim * mlp_ratio)
    ks = jax.random.split(key, 4)
    return dict(
        ln1_g=jnp.ones((1, dim), jnp.float32), ln1_b=jnp.zeros((1, dim), jnp.float32),
        wqkv=_xavier_uniform_t(ks[0], dim, 3 * dim),           # qkv_bias=False
        wproj=_xavier_uniform_t(ks[1], dim, dim),
        bproj=jnp.zeros((1, dim), jnp.float32),
        ln2_g=jnp.ones((1, dim), jnp.float32), ln2_b=jnp.zeros((1, dim), jnp.float32),
        w1=_xavier_uniform_t(ks[2], dim, Hm), b1=jnp.zeros((1, Hm), jnp.float32),
        w2=_xavier_uniform_t(ks[3], Hm, dim), b2=jnp.zeros((1, dim), jnp.float32),
    )


def block_reference(params, x, mask, num_heads):
    """Pure-JAX f32 reference matching the PyTorch Block forward (gamma=None path)."""
    B, N, C = x.shape
    H = num_heads
    D = C // H
    scale = D ** (-0.5)

    def ln(z, g, b, eps=1e-5):
        mu = z.mean(-1, keepdims=True)
        var = ((z - mu) ** 2).mean(-1, keepdims=True)
        return (z - mu) * jax.lax.rsqrt(var + eps) * g + b

    xn = ln(x, params["ln1_g"], params["ln1_b"])
    qkv = xn @ params["wqkv"]                                   # (B, N, 3C)
    qkv = qkv.reshape(B, N, 3, H, D).transpose(2, 0, 3, 1, 4)   # (3, B, H, N, D)
    q, k, v = qkv[0] * scale, qkv[1], qkv[2]
    attn = jnp.einsum('bhqd,bhkd->bhqk', q, k)
    if mask is not None:
        attn = attn + mask[:, None]
    attn = jax.nn.softmax(attn, axis=-1)
    out = jnp.einsum('bhqk,bhkd->bhqd', attn, v)
    out = out.transpose(0, 2, 1, 3).reshape(B, N, C)
    out = out @ params["wproj"] + params["bproj"]
    x = x + out
    xn2 = ln(x, params["ln2_g"], params["ln2_b"])
    h = jax.nn.gelu(xn2 @ params["w1"] + params["b1"], approximate=False)
    h = h @ params["w2"] + params["b2"]
    return x + h


# ----------------------------------- main -------------------------------------

if __name__ == "__main__":
    key = jax.random.PRNGKey(0)
    kx, kp, km = jax.random.split(key, 3)

    # Lane-dense small config: dim and seq are multiples of 128 (per perf review).
    B, N, C, num_heads, mlp_ratio = 2, 128, 128, 4, 4.0

    params = init_params(kp, C, mlp_ratio)
    x = jax.random.normal(kx, (B, N, C), jnp.float32)
    mask = jnp.where(jax.random.uniform(km, (B, N, N)) < 0.2, -1e9, 0.0).astype(jnp.float32)
    mask = mask.at[:, :, 0].set(0.0)   # keep at least one unmasked key per query row

    out = block_forward(params, x, mask, num_heads)
    out = jax.block_until_ready(out)

    ref = block_reference(params, x, mask, num_heads)
    assert out.shape == (B, N, C)
    assert bool(jnp.all(jnp.isfinite(out)))
    err = float(jnp.max(jnp.abs(out - ref)))
    assert err < 0.25, f"max abs err vs f32 reference too large: {err}"

    print("KERNEL_OK")
</pallas_src>

<mosaic_0001>
module attributes {stable_mosaic.version = 11 : i64} {
  func.func @_ln_qkv_kernel(%arg0: i32, %arg1: memref<128x128xf32, #tpu.memory_space<vmem>>, %arg2: memref<1x128xf32, #tpu.memory_space<vmem>>, %arg3: memref<1x128xf32, #tpu.memory_space<vmem>>, %arg4: memref<128x384xbf16, #tpu.memory_space<vmem>>, %arg5: memref<128x384xbf16, #tpu.memory_space<vmem>>) attributes {dimension_semantics = [#tpu.dimension_semantics<parallel>], iteration_bounds = array<i64: 2>, scalar_prefetch = 0 : i64, scratch_operands = 0 : i64, tpu.core_type = #tpu.core_type<tc>, window_params = [{transform_indices = @transform_0, window_bounds = array<i64: 128, 128>}, {pipeline_mode = #tpu.pipeline_mode<synchronous>, transform_indices = @transform_1, window_bounds = array<i64: 1, 128>}, {pipeline_mode = #tpu.pipeline_mode<synchronous>, transform_indices = @transform_2, window_bounds = array<i64: 1, 128>}, {pipeline_mode = #tpu.pipeline_mode<synchronous>, transform_indices = @transform_3, window_bounds = array<i64: 128, 384>}, {transform_indices = @transform_4, window_bounds = array<i64: 128, 384>}]} {
    %c0 = arith.constant 0 : index
    %c0_0 = arith.constant 0 : index
    %0 = vector.load %arg1[%c0, %c0_0] : memref<128x128xf32, #tpu.memory_space<vmem>>, vector<128x128xf32>
    %c0_1 = arith.constant 0 : index
    %c0_2 = arith.constant 0 : index
    %1 = vector.load %arg2[%c0_1, %c0_2] : memref<1x128xf32, #tpu.memory_space<vmem>>, vector<1x128xf32>
    %c0_3 = arith.constant 0 : index
    %c0_4 = arith.constant 0 : index
    %2 = vector.load %arg3[%c0_3, %c0_4] : memref<1x128xf32, #tpu.memory_space<vmem>>, vector<1x128xf32>
    %cst = arith.constant dense<0.000000e+00> : vector<128xf32>
    %3 = vector.multi_reduction <add>, %0, %cst [1] : vector<128x128xf32> to vector<128xf32>
    %4 = vector.shape_cast %3 : vector<128xf32> to vector<128x1xf32>
    %cst_5 = arith.constant 1.280000e+02 : f32
    %5 = vector.broadcast %cst_5 : f32 to vector<128x1xf32>
    %6 = arith.divf %4, %5 : vector<128x1xf32>
    %7 = vector.broadcast %6 : vector<128x1xf32> to vector<128x128xf32>
    %8 = arith.subf %0, %7 : vector<128x128xf32>
    %9 = arith.mulf %8, %8 : vector<128x128xf32>
    %cst_6 = arith.constant dense<0.000000e+00> : vector<128xf32>
    %10 = vector.multi_reduction <add>, %9, %cst_6 [1] : vector<128x128xf32> to vector<128xf32>
    %11 = vector.shape_cast %10 : vector<128xf32> to vector<128x1xf32>
    %cst_7 = arith.constant 1.280000e+02 : f32
    %12 = vector.broadcast %cst_7 : f32 to vector<128x1xf32>
    %13 = arith.divf %11, %12 : vector<128x1xf32>
    %14 = vector.broadcast %6 : vector<128x1xf32> to vector<128x128xf32>
    %15 = arith.subf %0, %14 : vector<128x128xf32>
    %cst_8 = arith.constant 9.99999974E-6 : f32
    %16 = vector.broadcast %cst_8 : f32 to vector<128x1xf32>
    %17 = arith.addf %13, %16 : vector<128x1xf32>
    %18 = math.rsqrt %17 : vector<128x1xf32>
    %19 = vector.broadcast %18 : vector<128x1xf32> to vector<128x128xf32>
    %20 = arith.mulf %15, %19 : vector<128x128xf32>
    %21 = vector.broadcast %1 : vector<1x128xf32> to vector<128x128xf32>
    %22 = arith.mulf %20, %21 : vector<128x128xf32>
    %23 = vector.broadcast %2 : vector<1x128xf32> to vector<128x128xf32>
    %24 = arith.addf %22, %23 : vector<128x128xf32>
    %25 = arith.truncf %24 : vector<128x128xf32> to vector<128x128xbf16>
    %c0_9 = arith.constant 0 : index
    %c0_10 = arith.constant 0 : index
    %26 = vector.load %arg4[%c0_9, %c0_10] : memref<128x384xbf16, #tpu.memory_space<vmem>>, vector<128x384xbf16>
    %cst_11 = arith.constant dense<0.000000e+00> : vector<128x384xf32>
    %27 = tpu.matmul %25, %26, %cst_11 {dimension_numbers = #tpu.dot_dimension_numbers<[1], [0], [0], [1], [0, 0, 1, 1], [], []>} : vector<128x128xbf16>, vector<128x384xbf16>, vector<128x384xf32> -> vector<128x384xf32>
    %28 = arith.truncf %27 : vector<128x384xf32> to vector<128x384xbf16>
    %c0_12 = arith.constant 0 : index
    %c0_13 = arith.constant 0 : index
    %29 = vector.load %arg5[%c0_12, %c0_13] : memref<128x384xbf16, #tpu.memory_space<vmem>>, vector<128x384xbf16>
    tpu.vector_store %arg5[%c0_12, %c0_13], %28 {strides = array<i32>} : memref<128x384xbf16, #tpu.memory_space<vmem>>, vector<128x384xbf16>,
    return
  }
  func.func @transform_0(%arg0: i32) -> (i32, i32) {
    %c0_i32 = arith.constant 0 : i32
    %c0_i32_0 = arith.constant 0 : i32
    return %arg0, %c0_i32 : i32, i32
  }
  func.func @transform_1(%arg0: i32) -> (i32, i32) {
    %c0_i32 = arith.constant 0 : i32
    %c0_i32_0 = arith.constant 0 : i32
    %c0_i32_1 = arith.constant 0 : i32
    return %c0_i32, %c0_i32_0 : i32, i32
  }
  func.func @transform_2(%arg0: i32) -> (i32, i32) {
    %c0_i32 = arith.constant 0 : i32
    %c0_i32_0 = arith.constant 0 : i32
    %c0_i32_1 = arith.constant 0 : i32
    return %c0_i32, %c0_i32_0 : i32, i32
  }
  func.func @transform_3(%arg0: i32) -> (i32, i32) {
    %c0_i32 = arith.constant 0 : i32
    %c0_i32_0 = arith.constant 0 : i32
    %c0_i32_1 = arith.constant 0 : i32
    return %c0_i32, %c0_i32_0 : i32, i32
  }
  func.func @transform_4(%arg0: i32) -> (i32, i32) {
    %c0_i32 = arith.constant 0 : i32
    %c0_i32_0 = arith.constant 0 : i32
    return %arg0, %c0_i32 : i32, i32
  }
}

</mosaic_0001>

<llo_original>
// kernel: tpu_custom_call.1
$region0: #{tpu_custom_call.1}
  #allocation0 [shape = 'u32[]', space=smem, size = 0x4, offset = 0x4, fixed_abs, tag = 'smem constant byte address 0x4 - core index']
  #allocation1 [shape = 'u32[144,128]{1,0:T(1,128)}', space=vmem, size = 0x12000, scoped, tag = 'internal scratch']
  %s0 = inlined_call_operand.hbm [shape: f32[256,128], index: 0, kind: input, shape index: {}]
  %s1 = inlined_call_operand.vmem [shape: f32[1,128], index: 1, kind: input, shape index: {}]
  %s2 = inlined_call_operand.vmem [shape: f32[1,128], index: 2, kind: input, shape index: {}]
  %s3 = inlined_call_operand.hbm [shape: bf16[128,384], index: 3, kind: input, shape index: {}]
  %s4 = inlined_call_operand.hbm [shape: bf16[256,384], index: 4, kind: output, shape index: {}]
  %s5 = sld [smem:[#allocation0]]
  $region57: #{tpu_custom_call.1} parent=0
    _
  %s7 = ssub.s32 1, %s5
  %s8 = scalar_select 0, %s7, %s5
  $region1: #{tpu_custom_call.1} parent=0
    #allocation2 [shape = 'u8[131072]{0}', space=vmem, size = 0x20000, scoped, tag = 'input window, operand 0']
    #allocation3 [shape = 's32[2]{0}', space=sflag, size = 0x8, scoped, tag = 'scoped memory for tpu_custom_call.1']
    #allocation4 [shape = 's32[2]{0}', space=sflag, size = 0x8, scoped, tag = 'scoped memory for tpu_custom_call.1']
    #allocation5 [shape = 'u8[98304]{0}', space=vmem, size = 0x18000, scoped, tag = 'input window, operand 3, single buffered']
    #allocation6 [shape = 's32[1]{0}', space=sflag, size = 0x4, scoped, tag = 'scoped memory for tpu_custom_call.1']
    #allocation7 [shape = 'u8[196608]{0}', space=vmem, size = 0x30000, scoped, tag = 'output window, operand 0']
    %9 = vsyncpa [#allocation3], 0
    %s10 = scalar_lea.sflag [#allocation3], 1
    %11 = vsyncpa %s10, 0
    %12 = vsyncpa [#allocation6], 0
    %13 = vsyncpa [#allocation4], 0
    %s14 = scalar_lea.sflag [#allocation4], 1
    %15 = vsyncpa %s14, 0
    loop: start=0, step=1, limit=4
    $region2: #{tpu_custom_call.1} parent=1 // loop_pre_header
      _
    $region3: #{tpu_custom_call.1} parent=1 // loop_header
      %s17 = sphi 0, %s21
      %p18 = scmp.ge.s32.totalorder %s17, 4
      %s27 = sphi 0, %s29
      %s30 = sphi 0, %s27
      %s31 = sphi 0, %s30
      %s47 = sphi 0, %s31
      %s51 = sphi 0, %s51
      %s53 = sphi 0, %s51
      %s54 = sphi 0, %s53
      %s68 = sphi 0, %s54
      %s72 = sphi 0, %s72
      %s74 = sphi 0, %s72
      %s75 = sphi 0, %s74
      %s89 = sphi 0, %s75
      %s93 = sphi 0, %s93
      %s95 = sphi 0, %s93
      %s96 = sphi 0, %s95
      %s110 = sphi 0, %s96
      %s116 = sphi 0, %s118
      %s119 = sphi 0, %s116
      %s120 = sphi 0, %s119
      %s136 = sphi 0, %s120
    $region4: #{tpu_custom_call.1} parent=1 // loop_header_branch
      %20 = sbr.rel (%p18) target = $region8
    $region5: #{tpu_custom_call.1} parent=1 // loop_body
      %s22 = ssub.s32 %s17, 1
      %s23 = ssub.s32 %s17, 2
      %s24 = sadd.s32 %s17, 1
      %s25 = ssub.s32 %s17, %s24
      %p26 = scmp.eq.s32.totalorder %s25, 0
      %s28 = sadd.s32 %s27, 1
      %s29 = scalar_select %p26, %s27, %s28
      %p32 = pneg %p26
      %p33 = scmp.eq.s32.totalorder %s17, 1
      %p34 = por %p32, %p33
      %p35 = scmp.ne.s32.totalorder %s27, %s30
      %p36 = scmp.eq.s32.totalorder %s17, 0
      %p37 = por %p35, %p36
      %p38 = scmp.ne.s32.totalorder %s27, %s30
      %p39 = scmp.eq.s32.totalorder %s22, 1
      %p40 = por %p38, %p39
      %p41 = scmp.ne.s32.totalorder %s30, %s31
      %p42 = scmp.eq.s32.totalorder %s22, 0
      %p43 = por %p41, %p42
      %p44 = scmp.ne.s32.totalorder %s30, %s31
      %p45 = scmp.eq.s32.totalorder %s23, 1
      %p46 = por %p44, %p45
      %p48 = scmp.ne.s32.totalorder %s31, %s47
      %p49 = scmp.eq.s32.totalorder %s23, 0
      %p50 = por %p48, %p49
      %s52 = sadd.s32 %s51, 1
      %p55 = scmp.eq.s32.totalorder %s17, 1
      %p56 = scmp.ne.s32.totalorder %s51, %s53
      %p57 = scmp.eq.s32.totalorder %s17, 0
      %p58 = por %p56, %p57
      %p59 = scmp.ne.s32.totalorder %s51, %s53
      %p60 = scmp.eq.s32.totalorder %s22, 1
      %p61 = por %p59, %p60
      %p62 = scmp.ne.s32.totalorder %s53, %s54
      %p63 = scmp.eq.s32.totalorder %s22, 0
      %p64 = por %p62, %p63
      %p65 = scmp.ne.s32.totalorder %s53, %s54
      %p66 = scmp.eq.s32.totalorder %s23, 1
      %p67 = por %p65, %p66
      %p69 = scmp.ne.s32.totalorder %s54, %s68
      %p70 = scmp.eq.s32.totalorder %s23, 0
      %p71 = por %p69, %p70
      %s73 = sadd.s32 %s72, 1
      %p76 = scmp.eq.s32.totalorder %s17, 1
      %p77 = scmp.ne.s32.totalorder %s72, %s74
      %p78 = scmp.eq.s32.totalorder %s17, 0
      %p79 = por %p77, %p78
      %p80 = scmp.ne.s32.totalorder %s72, %s74
      %p81 = scmp.eq.s32.totalorder %s22, 1
      %p82 = por %p80, %p81
      %p83 = scmp.ne.s32.totalorder %s74, %s75
      %p84 = scmp.eq.s32.totalorder %s22, 0
      %p85 = por %p83, %p84
      %p86 = scmp.ne.s32.totalorder %s74, %s75
      %p87 = scmp.eq.s32.totalorder %s23, 1
      %p88 = por %p86, %p87
      %p90 = scmp.ne.s32.totalorder %s75, %s89
      %p91 = scmp.eq.s32.totalorder %s23, 0
      %p92 = por %p90, %p91
      %s94 = sadd.s32 %s93, 1
      %p97 = scmp.eq.s32.totalorder %s17, 1
      %p98 = scmp.ne.s32.totalorder %s93, %s95
      %p99 = scmp.eq.s32.totalorder %s17, 0
      %p100 = por %p98, %p99
      %p101 = scmp.ne.s32.totalorder %s93, %s95
      %p102 = scmp.eq.s32.totalorder %s22, 1
      %p103 = por %p101, %p102
      %p104 = scmp.ne.s32.totalorder %s95, %s96
      %p105 = scmp.eq.s32.totalorder %s22, 0
      %p106 = por %p104, %p105
      %p107 = scmp.ne.s32.totalorder %s95, %s96
      %p108 = scmp.eq.s32.totalorder %s23, 1
      %p109 = por %p107, %p108
      %p111 = scmp.ne.s32.totalorder %s96, %s110
      %p112 = scmp.eq.s32.totalorder %s23, 0
      %p113 = por %p111, %p112
      %s114 = ssub.s32 %s17, %s24
      %p115 = scmp.eq.s32.totalorder %s114, 0
      %s117 = sadd.s32 %s116, 1
      %s118 = scalar_select %p115, %s116, %s117
      %p121 = pneg %p115
      %p122 = scmp.eq.s32.totalorder %s17, 1
      %p123 = por %p121, %p122
      %p124 = scmp.ne.s32.totalorder %s116, %s119
      %p125 = scmp.eq.s32.totalorder %s17, 0
      %p126 = por %p124, %p125
      %p127 = scmp.ne.s32.totalorder %s116, %s119
      %p128 = scmp.eq.s32.totalorder %s22, 1
      %p129 = por %p127, %p128
      %p130 = scmp.ne.s32.totalorder %s119, %s120
      %p131 = scmp.eq.s32.totalorder %s22, 0
      %p132 = por %p130, %p131
      %p133 = scmp.ne.s32.totalorder %s119, %s120
      %p134 = scmp.eq.s32.totalorder %s23, 1
      %p135 = por %p133, %p134
      %p137 = scmp.ne.s32.totalorder %s120, %s136
      %p138 = scmp.eq.s32.totalorder %s23, 0
      %p139 = por %p137, %p138
      %p140 = scmp.le.s32.totalorder 1, %s17
      %p141 = scmp.lt.s32.totalorder %s17, 3
      %p142 = pnand %p140, %p141
      %p143 = pneg %p142
      // Predicated region
      $region9: #{tpu_custom_call.1} parent=5 // pred_check
        _
      $region10: #{tpu_custom_call.1} parent=5 // pred_check_branch
        %145 = sbr.rel (%p142) target = $region12
      $region11: #{tpu_custom_call.1} parent=5 // pred_region
        %s146 = ssub.s32 %s17, 1
        // Predicated region
        $region13: #{tpu_custom_call.1} parent=11 // pred_check
          %p147 = pneg %p64
        $region14: #{tpu_custom_call.1} parent=11 // pred_check_branch
          %149 = sbr.rel (%p147) target = $region16
        $region15: #{tpu_custom_call.1} parent=11 // pred_region
          _
        $region16: #{tpu_custom_call.1} parent=11 // pred_fallthru
          _
        // Predicated region
        $region17: #{tpu_custom_call.1} parent=11 // pred_check
          %p150 = pneg %p85
        $region18: #{tpu_custom_call.1} parent=11 // pred_check_branch
          %152 = sbr.rel (%p150) target = $region20
        $region19: #{tpu_custom_call.1} parent=11 // pred_region
          _
        $region20: #{tpu_custom_call.1} parent=11 // pred_fallthru
          _
        // Predicated region
        $region21: #{tpu_custom_call.1} parent=11 // pred_check
          %p153 = pneg %p106
        $region22: #{tpu_custom_call.1} parent=11 // pred_check_branch
          %155 = sbr.rel (%p153) target = $region24
        $region23: #{tpu_custom_call.1} parent=11 // pred_region
          %s157 = ssub.s32 3072, 3072
          %158 = vsyncadd [#allocation6], %s157
          %s159 = sshll.u32 [#allocation5], 4
          %s160 = int_to_ptr.vmem [resolvable:$true] %s159
          %165 = dma.hbm_to_vmem [thread:$0]  %s3, 3072, %s160, [#allocation6], 192, 192, 12
        $region24: #{tpu_custom_call.1} parent=11 // pred_fallthru
          _
      $region12: #{tpu_custom_call.1} parent=5 // pred_fallthru
        _
      %p166 = scmp.lt.s32.totalorder %s17, 2
      // Predicated region
      $region25: #{tpu_custom_call.1} parent=5 // pred_check
        %p167 = pneg %p166
      $region26: #{tpu_custom_call.1} parent=5 // pred_check_branch
        %169 = sbr.rel (%p167) target = $region28
      $region27: #{tpu_custom_call.1} parent=5 // pred_region
        // Predicated region
        $region29: #{tpu_custom_call.1} parent=27 // pred_check
          %p170 = pneg %p37
        $region30: #{tpu_custom_call.1} parent=27 // pred_check_branch
          %172 = sbr.rel (%p170) target = $region32
        $region31: #{tpu_custom_call.1} parent=27 // pred_region
          %s173 = sand.u32 %s27, 1
          %s174 = scalar_lea.sflag [#allocation3], %s173
          %s175 = sand.u32 %s27, 1
          %s176 = smul.addr %s175, 128
          %s177 = scalar_lea.vmem [#allocation2], %s176
          %s178 = smul.u32 16, %s17
          %s180 = ssub.s32 2048, 2048
          %181 = vsyncadd %s174, %s180
          %s182 = smul.addr %s178, 128
          %s183 = scalar_lea.hbm %s0, %s182
          %s184 = sshll.u32 %s177, 4
          %s185 = int_to_ptr.vmem [resolvable:$true] %s184
          %190 = dma.hbm_to_vmem [thread:$0]  %s183, 2048, %s185, %s174, 128, 128, 8
        $region32: #{tpu_custom_call.1} parent=27 // pred_fallthru
          _
      $region28: #{tpu_custom_call.1} parent=5 // pred_fallthru
        _
      %p191 = scmp.le.s32.totalorder 1, %s17
      %p192 = scmp.lt.s32.totalorder %s17, 3
      %p193 = pnand %p191, %p192
      %p194 = pneg %p193
      // Predicated region
      $region33: #{tpu_custom_call.1} parent=5 // pred_check
        _
      $region34: #{tpu_custom_call.1} parent=5 // pred_check_branch
        %196 = sbr.rel (%p193) target = $region36
      $region35: #{tpu_custom_call.1} parent=5 // pred_region
        %s197 = ssub.s32 %s17, 1
        %s198 = sand.u32 %s30, 1
        %s199 = scalar_lea.sflag [#allocation3], %s198
        %s200 = sand.u32 %s30, 1
        %s201 = smul.addr %s200, 128
        %s202 = scalar_lea.vmem [#allocation2], %s201
        // Predicated region
        $region37: #{tpu_custom_call.1} parent=35 // pred_check
          %p203 = pneg %p43
        $region38: #{tpu_custom_call.1} parent=35 // pred_check_branch
          %205 = sbr.rel (%p203) target = $region40
        $region39: #{tpu_custom_call.1} parent=35 // pred_region
          %206 = dma.done %s199, 2048
        $region40: #{tpu_custom_call.1} parent=35 // pred_fallthru
          _
        // Predicated region
        $region41: #{tpu_custom_call.1} parent=35 // pred_check
          %p207 = pneg %p106
        $region42: #{tpu_custom_call.1} parent=35 // pred_check_branch
          %209 = sbr.rel (%p207) target = $region44
        $region43: #{tpu_custom_call.1} parent=35 // pred_region
          %210 = dma.done [#allocation6], 3072
        $region44: #{tpu_custom_call.1} parent=35 // pred_fallthru
          _
        %s211 = sand.u32 %s30, 1
        %s212 = scalar_lea.sflag [#allocation3], %s211
        %s213 = sand.u32 %s30, 1
        %s214 = smul.addr %s213, 128
        %s215 = scalar_lea.vmem [#allocation2], %s214
        %p216 = pneg %p43
        %p217 = pneg %p40
        %p218 = pneg %p64
        %p219 = pneg %p61
        %p220 = pneg %p85
        %p221 = pneg %p82
        %p222 = pneg %p106
        %p223 = pneg %p103
        %p224 = pneg %p132
        %p225 = pneg %p129
        %s226 = sand.u32 %s119, 1
        %s227 = scalar_lea.sflag [#allocation4], %s226
        %s228 = sand.u32 %s119, 1
        %s229 = smul.addr %s228, 192
        %s230 = scalar_lea.vmem [#allocation7], %s229
        %s231 = smul.u32 16, %s22
        %s232 = smul.u32 16, %s22
        %v234 = vld [vmem:[%s202] sm:$0xff]
        %v235 = vld [vmem:[%s202 + $0x8] sm:$0xff]
        %v236 = vld [vmem:[%s202 + $0x10] sm:$0xff]
        %v237 = vld [vmem:[%s202 + $0x18] sm:$0xff]
        %v238 = vld [vmem:[%s202 + $0x20] sm:$0xff]
        %v239 = vld [vmem:[%s202 + $0x28] sm:$0xff]
        %v240 = vld [vmem:[%s202 + $0x30] sm:$0xff]
        %v241 = vld [vmem:[%s202 + $0x38] sm:$0xff]
        %v242 = vld [vmem:[%s202 + $0x40] sm:$0xff]
        %v243 = vld [vmem:[%s202 + $0x48] sm:$0xff]
        %v244 = vld [vmem:[%s202 + $0x50] sm:$0xff]
        %v245 = vld [vmem:[%s202 + $0x58] sm:$0xff]
        %v246 = vld [vmem:[%s202 + $0x60] sm:$0xff]
        %v247 = vld [vmem:[%s202 + $0x68] sm:$0xff]
        %v248 = vld [vmem:[%s202 + $0x70] sm:$0xff]
        %v249 = vld [vmem:[%s202 + $0x78] sm:$0xff]
        %v250 = vld [vmem:[%s1] sm:$0x1]
        %v251 = vld [vmem:[%s2] sm:$0x1]
        %252 = vadd.xlane.f32.xlu0 %v234
        %v253 = vpop.xlane.xlu0 %252
        %254 = vadd.xlane.f32.xlu0 %v235
        %v255 = vpop.xlane.xlu0 %254
        %256 = vadd.xlane.f32.xlu0 %v236
        %v257 = vpop.xlane.xlu0 %256
        %258 = vadd.xlane.f32.xlu0 %v237
        %v259 = vpop.xlane.xlu0 %258
        %260 = vadd.xlane.f32.xlu0 %v238
        %v261 = vpop.xlane.xlu0 %260
        %262 = vadd.xlane.f32.xlu0 %v239
        %v263 = vpop.xlane.xlu0 %262
        %264 = vadd.xlane.f32.xlu0 %v240
        %v265 = vpop.xlane.xlu0 %264
        %266 = vadd.xlane.f32.xlu0 %v241
        %v267 = vpop.xlane.xlu0 %266
        %268 = vadd.xlane.f32.xlu0 %v242
        %v269 = vpop.xlane.xlu0 %268
        %270 = vadd.xlane.f32.xlu0 %v243
        %v271 = vpop.xlane.xlu0 %270
        %272 = vadd.xlane.f32.xlu0 %v244
        %v273 = vpop.xlane.xlu0 %272
        %274 = vadd.xlane.f32.xlu0 %v245
        %v275 = vpop.xlane.xlu0 %274
        %276 = vadd.xlane.f32.xlu0 %v246
        %v277 = vpop.xlane.xlu0 %276
        %278 = vadd.xlane.f32.xlu0 %v247
        %v279 = vpop.xlane.xlu0 %278
        %280 = vadd.xlane.f32.xlu0 %v248
        %v281 = vpop.xlane.xlu0 %280
        %282 = vadd.xlane.f32.xlu0 %v249
        %v283 = vpop.xlane.xlu0 %282
        %v284 = vrcp.pop 128.0
        %v285 = vmul.f32 %v253, %v284
        %v286 = vmul.f32 %v255, %v284
        %v287 = vmul.f32 %v257, %v284
        %v288 = vmul.f32 %v259, %v284
        %v289 = vmul.f32 %v261, %v284
        %v290 = vmul.f32 %v263, %v284
        %v291 = vmul.f32 %v265, %v284
        %v292 = vmul.f32 %v267, %v284
        %v293 = vmul.f32 %v269, %v284
        %v294 = vmul.f32 %v271, %v284
        %v295 = vmul.f32 %v273, %v284
        %v296 = vmul.f32 %v275, %v284
        %v297 = vmul.f32 %v277, %v284
        %v298 = vmul.f32 %v279, %v284
        %v299 = vmul.f32 %v281, %v284
        %v300 = vmul.f32 %v283, %v284
        %v301 = vsub.f32 %v234, %v285
        %v302 = vsub.f32 %v235, %v286
        %v303 = vsub.f32 %v236, %v287
        %v304 = vsub.f32 %v237, %v288
        %v305 = vsub.f32 %v238, %v289
        %v306 = vsub.f32 %v239, %v290
        %v307 = vsub.f32 %v240, %v291
        %v308 = vsub.f32 %v241, %v292
        %v309 = vsub.f32 %v242, %v293
        %v310 = vsub.f32 %v243, %v294
        %v311 = vsub.f32 %v244, %v295
        %v312 = vsub.f32 %v245, %v296
        %v313 = vsub.f32 %v246, %v297
        %v314 = vsub.f32 %v247, %v298
        %v315 = vsub.f32 %v248, %v299
        %v316 = vsub.f32 %v249, %v300
        %v317 = vmul.f32 %v301, %v301
        %v318 = vmul.f32 %v302, %v302
        %v319 = vmul.f32 %v303, %v303
        %v320 = vmul.f32 %v304, %v304
        %v321 = vmul.f32 %v305, %v305
        %v322 = vmul.f32 %v306, %v306
        %v323 = vmul.f32 %v307, %v307
        %v324 = vmul.f32 %v308, %v308
        %v325 = vmul.f32 %v309, %v309
        %v326 = vmul.f32 %v310, %v310
        %v327 = vmul.f32 %v311, %v311
        %v328 = vmul.f32 %v312, %v312
        %v329 = vmul.f32 %v313, %v313
        %v330 = vmul.f32 %v314, %v314
        %v331 = vmul.f32 %v315, %v315
        %v332 = vmul.f32 %v316, %v316
        %333 = vadd.xlane.f32.xlu0 %v317
        %v334 = vpop.xlane.xlu0 %333
        %335 = vadd.xlane.f32.xlu0 %v318
        %v336 = vpop.xlane.xlu0 %335
        %337 = vadd.xlane.f32.xlu0 %v319
        %v338 = vpop.xlane.xlu0 %337
        %339 = vadd.xlane.f32.xlu0 %v320
        %v340 = vpop.xlane.xlu0 %339
        %341 = vadd.xlane.f32.xlu0 %v321
        %v342 = vpop.xlane.xlu0 %341
        %343 = vadd.xlane.f32.xlu0 %v322
        %v344 = vpop.xlane.xlu0 %343
        %345 = vadd.xlane.f32.xlu0 %v323
        %v346 = vpop.xlane.xlu0 %345
        %347 = vadd.xlane.f32.xlu0 %v324
        %v348 = vpop.xlane.xlu0 %347
        %349 = vadd.xlane.f32.xlu0 %v325
        %v350 = vpop.xlane.xlu0 %349
        %351 = vadd.xlane.f32.xlu0 %v326
        %v352 = vpop.xlane.xlu0 %351
        %353 = vadd.xlane.f32.xlu0 %v327
        %v354 = vpop.xlane.xlu0 %353
        %355 = vadd.xlane.f32.xlu0 %v328
        %v356 = vpop.xlane.xlu0 %355
        %357 = vadd.xlane.f32.xlu0 %v329
        %v358 = vpop.xlane.xlu0 %357
        %359 = vadd.xlane.f32.xlu0 %v330
        %v360 = vpop.xlane.xlu0 %359
        %361 = vadd.xlane.f32.xlu0 %v331
        %v362 = vpop.xlane.xlu0 %361
        %363 = vadd.xlane.f32.xlu0 %v332
        %v364 = vpop.xlane.xlu0 %363
        %v365 = vmul.f32 %v334, %v284
        %v366 = vmul.f32 %v336, %v284
        %v367 = vmul.f32 %v338, %v284
        %v368 = vmul.f32 %v340, %v284
        %v369 = vmul.f32 %v342, %v284
        %v370 = vmul.f32 %v344, %v284
        %v371 = vmul.f32 %v346, %v284
        %v372 = vmul.f32 %v348, %v284
        %v373 = vmul.f32 %v350, %v284
        %v374 = vmul.f32 %v352, %v284
        %v375 = vmul.f32 %v354, %v284
        %v376 = vmul.f32 %v356, %v284
        %v377 = vmul.f32 %v358, %v284
        %v378 = vmul.f32 %v360, %v284
        %v379 = vmul.f32 %v362, %v284
        %v380 = vmul.f32 %v364, %v284
        %v381 = vadd.f32 %v365, 1e-05
        %v382 = vadd.f32 %v366, 1e-05
        %v383 = vadd.f32 %v367, 1e-05
        %v384 = vadd.f32 %v368, 1e-05
        %v385 = vadd.f32 %v369, 1e-05
        %v386 = vadd.f32 %v370, 1e-05
        %v387 = vadd.f32 %v371, 1e-05
        %v388 = vadd.f32 %v372, 1e-05
        %v389 = vadd.f32 %v373, 1e-05
        %v390 = vadd.f32 %v374, 1e-05
        %v391 = vadd.f32 %v375, 1e-05
        %v392 = vadd.f32 %v376, 1e-05
        %v393 = vadd.f32 %v377, 1e-05
        %v394 = vadd.f32 %v378, 1e-05
        %v395 = vadd.f32 %v379, 1e-05
        %v396 = vadd.f32 %v380, 1e-05
        %v397 = vrsqrt.pop %v381
        %v398 = vrsqrt.pop %v382
        %v399 = vrsqrt.pop %v383
        %v400 = vrsqrt.pop %v384
        %v401 = vrsqrt.pop %v385
        %v402 = vrsqrt.pop %v386
        %v403 = vrsqrt.pop %v387
        %v404 = vrsqrt.pop %v388
        %v405 = vrsqrt.pop %v389
        %v406 = vrsqrt.pop %v390
        %v407 = vrsqrt.pop %v391
        %v408 = vrsqrt.pop %v392
        %v409 = vrsqrt.pop %v393
        %v410 = vrsqrt.pop %v394
        %v411 = vrsqrt.pop %v395
        %v412 = vrsqrt.pop %v396
        %v413 = vmul.f32 %v301, %v397
        %v414 = vmul.f32 %v302, %v398
        %v415 = vmul.f32 %v303, %v399
        %v416 = vmul.f32 %v304, %v400
        %v417 = vmul.f32 %v305, %v401
        %v418 = vmul.f32 %v306, %v402
        %v419 = vmul.f32 %v307, %v403
        %v420 = vmul.f32 %v308, %v404
        %v421 = vmul.f32 %v309, %v405
        %v422 = vmul.f32 %v310, %v406
        %v423 = vmul.f32 %v311, %v407
        %v424 = vmul.f32 %v312, %v408
        %v425 = vmul.f32 %v313, %v409
        %v426 = vmul.f32 %v314, %v410
        %v427 = vmul.f32 %v315, %v411
        %v428 = vmul.f32 %v316, %v412
        %v430 = vlaneseq
        %v431 = vshrl.u32 %v430, 7
        %v432 = vsub.s32 0, %v431
        %v433 = vrot.slane %v250, %v432
        %v435 = vmul.f32 %v413, %v433
        %v436 = vmul.f32 %v414, %v433
        %v437 = vmul.f32 %v415, %v433
        %v438 = vmul.f32 %v416, %v433
        %v439 = vmul.f32 %v417, %v433
        %v440 = vmul.f32 %v418, %v433
        %v441 = vmul.f32 %v419, %v433
        %v442 = vmul.f32 %v420, %v433
        %v443 = vmul.f32 %v421, %v433
        %v444 = vmul.f32 %v422, %v433
        %v445 = vmul.f32 %v423, %v433
        %v446 = vmul.f32 %v424, %v433
        %v447 = vmul.f32 %v425, %v433
        %v448 = vmul.f32 %v426, %v433
        %v449 = vmul.f32 %v427, %v433
        %v450 = vmul.f32 %v428, %v433
        %v452 = vlaneseq
        %v453 = vshrl.u32 %v452, 7
        %v454 = vsub.s32 0, %v453
        %v455 = vrot.slane %v251, %v454
        %v457 = vadd.f32 %v435, %v455
        %v458 = vadd.f32 %v436, %v455
        %v459 = vadd.f32 %v437, %v455
        %v460 = vadd.f32 %v438, %v455
        %v461 = vadd.f32 %v439, %v455
        %v462 = vadd.f32 %v440, %v455
        %v463 = vadd.f32 %v441, %v455
        %v464 = vadd.f32 %v442, %v455
        %v465 = vadd.f32 %v443, %v455
        %v466 = vadd.f32 %v444, %v455
        %v467 = vadd.f32 %v445, %v455
        %v468 = vadd.f32 %v446, %v455
        %v469 = vadd.f32 %v447, %v455
        %v470 = vadd.f32 %v448, %v455
        %v471 = vadd.f32 %v449, %v455
        %v472 = vadd.f32 %v450, %v455
        %v473 = vpack.c.bf16 %v458, %v457
        %v474 = vpack.c.bf16 %v460, %v459
        %v475 = vpack.c.bf16 %v462, %v461
        %v476 = vpack.c.bf16 %v464, %v463
        %v477 = vpack.c.bf16 %v466, %v465
        %v478 = vpack.c.bf16 %v468, %v467
        %v479 = vpack.c.bf16 %v470, %v469
        %v480 = vpack.c.bf16 %v472, %v471
        %v481 = vld [vmem:[#allocation5] sm:$0xff]
        %v482 = vld [vmem:[#allocation5 + $0x8] sm:$0xf]
        %v483 = vld [vmem:[#allocation5 + $0xc] sm:$0xff]
        %v484 = vld [vmem:[#allocation5 + $0x14] sm:$0xf]
        %v485 = vld [vmem:[#allocation5 + $0x18] sm:$0xff]
        %v486 = vld [vmem:[#allocation5 + $0x20] sm:$0xf]
        %v487 = vld [vmem:[#allocation5 + $0x24] sm:$0xff]
        %v488 = vld [vmem:[#allocation5 + $0x2c] sm:$0xf]
        %v489 = vld [vmem:[#allocation5 + $0x30] sm:$0xff]
        %v490 = vld [vmem:[#allocation5 + $0x38] sm:$0xf]
        %v491 = vld [vmem:[#allocation5 + $0x3c] sm:$0xff]
        %v492 = vld [vmem:[#allocation5 + $0x44] sm:$0xf]
        %v493 = vld [vmem:[#allocation5 + $0x48] sm:$0xff]
        %v494 = vld [vmem:[#allocation5 + $0x50] sm:$0xf]
        %v495 = vld [vmem:[#allocation5 + $0x54] sm:$0xff]
        %v496 = vld [vmem:[#allocation5 + $0x5c] sm:$0xf]
        %v497 = vld [vmem:[#allocation5 + $0x60] sm:$0xff]
        %v498 = vld [vmem:[#allocation5 + $0x68] sm:$0xf]
        %v499 = vld [vmem:[#allocation5 + $0x6c] sm:$0xff]
        %v500 = vld [vmem:[#allocation5 + $0x74] sm:$0xf]
        %v501 = vld [vmem:[#allocation5 + $0x78] sm:$0xff]
        %v502 = vld [vmem:[#allocation5 + $0x80] sm:$0xf]
        %v503 = vld [vmem:[#allocation5 + $0x84] sm:$0xff]
        %v504 = vld [vmem:[#allocation5 + $0x8c] sm:$0xf]
        %v505 = vld [vmem:[#allocation5 + $0x90] sm:$0xff]
        %v506 = vld [vmem:[#allocation5 + $0x98] sm:$0xf]
        %v507 = vld [vmem:[#allocation5 + $0x9c] sm:$0xff]
        %v508 = vld [vmem:[#allocation5 + $0xa4] sm:$0xf]
        %v509 = vld [vmem:[#allocation5 + $0xa8] sm:$0xff]
        %v510 = vld [vmem:[#allocation5 + $0xb0] sm:$0xf]
        %v511 = vld [vmem:[#allocation5 + $0xb4] sm:$0xff]
        %v512 = vld [vmem:[#allocation5 + $0xbc] sm:$0xf]
        %v545 = vunpack.c.l.b16 %v481
        %v546 = vunpack.c.h.b16 %v481
        %v547 = vunpack.c.l.b16 %v482
        %v548 = vunpack.c.l.b16 %v483
        %v549 = vunpack.c.h.b16 %v483
        %v550 = vunpack.c.l.b16 %v484
        %v551 = vunpack.c.l.b16 %v485
        %v552 = vunpack.c.h.b16 %v485
        %v553 = vunpack.c.l.b16 %v486
        %v554 = vunpack.c.l.b16 %v487
        %v555 = vunpack.c.h.b16 %v487
        %v556 = vunpack.c.l.b16 %v488
        %v557 = vunpack.c.l.b16 %v489
        %v558 = vunpack.c.h.b16 %v489
        %v559 = vunpack.c.l.b16 %v490
        %v560 = vunpack.c.l.b16 %v491
        %v561 = vunpack.c.h.b16 %v491
        %v562 = vunpack.c.l.b16 %v492
        %v563 = vunpack.c.l.b16 %v493
        %v564 = vunpack.c.h.b16 %v493
        %v565 = vunpack.c.l.b16 %v494
        %v566 = vunpack.c.l.b16 %v495
        %v567 = vunpack.c.h.b16 %v495
        %v568 = vunpack.c.l.b16 %v496
        %v569 = vunpack.c.l.b16 %v497
        %v570 = vunpack.c.h.b16 %v497
        %v571 = vunpack.c.l.b16 %v498
        %v572 = vunpack.c.l.b16 %v499
        %v573 = vunpack.c.h.b16 %v499
        %v574 = vunpack.c.l.b16 %v500
        %v575 = vunpack.c.l.b16 %v501
        %v576 = vunpack.c.h.b16 %v501
        %v577 = vunpack.c.l.b16 %v502
        %v578 = vunpack.c.l.b16 %v503
        %v579 = vunpack.c.h.b16 %v503
        %v580 = vunpack.c.l.b16 %v504
        %v581 = vunpack.c.l.b16 %v505
        %v582 = vunpack.c.h.b16 %v505
        %v583 = vunpack.c.l.b16 %v506
        %v584 = vunpack.c.l.b16 %v507
        %v585 = vunpack.c.h.b16 %v507
        %v586 = vunpack.c.l.b16 %v508
        %v587 = vunpack.c.l.b16 %v509
        %v588 = vunpack.c.h.b16 %v509
        %v589 = vunpack.c.l.b16 %v510
        %v590 = vunpack.c.l.b16 %v511
        %v591 = vunpack.c.h.b16 %v511
        %v592 = vunpack.c.l.b16 %v512
        %v593 = vpack.c.b16 %v548, %v545
        %v594 = vpack.c.b16 %v549, %v546
        %v595 = vpack.c.b16 %v550, %v547
        %v596 = vpack.c.b16 %v554, %v551
        %v597 = vpack.c.b16 %v555, %v552
        %v598 = vpack.c.b16 %v556, %v553
        %v599 = vpack.c.b16 %v560, %v557
        %v600 = vpack.c.b16 %v561, %v558
        %v601 = vpack.c.b16 %v562, %v559
        %v602 = vpack.c.b16 %v566, %v563
        %v603 = vpack.c.b16 %v567, %v564
        %v604 = vpack.c.b16 %v568, %v565
        %v605 = vpack.c.b16 %v572, %v569
        %v606 = vpack.c.b16 %v573, %v570
        %v607 = vpack.c.b16 %v574, %v571
        %v608 = vpack.c.b16 %v578, %v575
        %v609 = vpack.c.b16 %v579, %v576
        %v610 = vpack.c.b16 %v580, %v577
        %v611 = vpack.c.b16 %v584, %v581
        %v612 = vpack.c.b16 %v585, %v582
        %v613 = vpack.c.b16 %v586, %v583
        %v614 = vpack.c.b16 %v590, %v587
        %v615 = vpack.c.b16 %v591, %v588
        %v616 = vpack.c.b16 %v592, %v589
        %641 = vmatprep.subr.bf16.mxu0 %v594
        %642 = vmatpush1.bf16.msra.mxu0 %v593
        %643 = vmatprep.subr.bf16.mxu0 %v597
        %644 = vmatpush1.bf16.msra.mxu0 %v596
        %645 = vmatprep.subr.bf16.mxu0 %v600
        %646 = vmatpush1.bf16.msra.mxu0 %v599
        %647 = vmatprep.subr.bf16.mxu0 %v603
        %648 = vmatpush1.bf16.msra.mxu0 %v602
        %649 = vmatprep.subr.bf16.mxu0 %v606
        %650 = vmatpush1.bf16.msra.mxu0 %v605
        %651 = vmatprep.subr.bf16.mxu0 %v609
        %652 = vmatpush1.bf16.msra.mxu0 %v608
        %653 = vmatprep.subr.bf16.mxu0 %v612
        %654 = vmatpush1.bf16.msra.mxu0 %v611
        %655 = vmatprep.subr.bf16.mxu0 %v615
        %656 = vmatpush1.bf16.msra.mxu0 %v614
        %657 = vmatprep.subr.bf16.mxu0 0
        %658 = vmatpush1.bf16.msra.mxu0 0
        %659 = vmatprep.subr.bf16.mxu0 0
        %660 = vmatpush1.bf16.msra.mxu0 0
        %661 = vmatprep.subr.bf16.mxu0 0
        %662 = vmatpush1.bf16.msra.mxu0 0
        %663 = vmatprep.subr.bf16.mxu0 0
        %664 = vmatpush1.bf16.msra.mxu0 0
        %665 = vmatprep.subr.bf16.mxu0 0
        %666 = vmatpush1.bf16.msra.mxu0 0
        %667 = vmatprep.subr.bf16.mxu0 0
        %668 = vmatpush1.bf16.msra.mxu0 0
        %669 = vmatprep.subr.bf16.mxu0 0
        %670 = vmatpush1.bf16.msra.mxu0 0
        %671 = vmatprep.subr.bf16.mxu0 0
        %672 = vmatpush1.bf16.msra.mxu0 0
        %673 = vmatprep.mubr.bf16.mxu0 0
        %674 = vmatmul.mubr.bf16.gmra.mrb[0].mxu0 %v473
        %v675 = vpop.f32.mrb[0].mxu0
        %v676 = vadd.f32 0.0, %v675
        %v677 = vpop.f32.mrb[0].mxu0
        %v678 = vadd.f32 0.0, %v677
        %v679 = vpop.f32.mrb[0].mxu0
        %v680 = vadd.f32 0.0, %v679
        %v681 = vpop.f32.mrb[0].mxu0
        %v682 = vadd.f32 0.0, %v681
        %683 = vmatprep.mubr.bf16.mxu0 0
        %684 = vmatmul.mubr.bf16.gmra.mrb[0].mxu0 %v474
        %v685 = vpop.f32.mrb[0].mxu0
        %v686 = vadd.f32 0.0, %v685
        %v687 = vpop.f32.mrb[0].mxu0
        %v688 = vadd.f32 0.0, %v687
        %v689 = vpop.f32.mrb[0].mxu0
        %v690 = vadd.f32 0.0, %v689
        %v691 = vpop.f32.mrb[0].mxu0
        %v692 = vadd.f32 0.0, %v691
        %693 = vmatprep.mubr.bf16.mxu0 0
        %694 = vmatmul.mubr.bf16.gmra.mrb[0].mxu0 %v475
        %v695 = vpop.f32.mrb[0].mxu0
        %v696 = vadd.f32 0.0, %v695
        %v697 = vpop.f32.mrb[0].mxu0
        %v698 = vadd.f32 0.0, %v697
        %v699 = vpop.f32.mrb[0].mxu0
        %v700 = vadd.f32 0.0, %v699
        %v701 = vpop.f32.mrb[0].mxu0
        %v702 = vadd.f32 0.0, %v701
        %703 = vmatprep.mubr.bf16.mxu0 0
        %704 = vmatmul.mubr.bf16.gmra.mrb[0].mxu0 %v476
        %v705 = vpop.f32.mrb[0].mxu0
        %v706 = vadd.f32 0.0, %v705
        %v707 = vpop.f32.mrb[0].mxu0
        %v708 = vadd.f32 0.0, %v707
        %v709 = vpop.f32.mrb[0].mxu0
        %v710 = vadd.f32 0.0, %v709
        %v711 = vpop.f32.mrb[0].mxu0
        %v712 = vadd.f32 0.0, %v711
        %713 = vmatprep.mubr.bf16.mxu0 0
        %714 = vmatmul.mubr.bf16.gmra.mrb[0].mxu0 %v477
        %v715 = vpop.f32.mrb[0].mxu0
        %v716 = vadd.f32 0.0, %v715
        %v717 = vpop.f32.mrb[0].mxu0
        %v718 = vadd.f32 0.0, %v717
        %v719 = vpop.f32.mrb[0].mxu0
        %v720 = vadd.f32 0.0, %v719
        %v721 = vpop.f32.mrb[0].mxu0
        %v722 = vadd.f32 0.0, %v721
        %723 = vmatprep.mubr.bf16.mxu0 0
        %724 = vmatmul.mubr.bf16.gmra.mrb[0].mxu0 %v478
        %v725 = vpop.f32.mrb[0].mxu0
        %v726 = vadd.f32 0.0, %v725
        %v727 = vpop.f32.mrb[0].mxu0
        %v728 = vadd.f32 0.0, %v727
        %v729 = vpop.f32.mrb[0].mxu0
        %v730 = vadd.f32 0.0, %v729
        %v731 = vpop.f32.mrb[0].mxu0
        %v732 = vadd.f32 0.0, %v731
        %733 = vmatprep.mubr.bf16.mxu0 0
        %734 = vmatmul.mubr.bf16.gmra.mrb[0].mxu0 %v479
        %v735 = vpop.f32.mrb[0].mxu0
        %v736 = vadd.f32 0.0, %v735
        %v737 = vpop.f32.mrb[0].mxu0
        %v738 = vadd.f32 0.0, %v737
        %v739 = vpop.f32.mrb[0].mxu0
        %v740 = vadd.f32 0.0, %v739
        %v741 = vpop.f32.mrb[0].mxu0
        %v742 = vadd.f32 0.0, %v741
        %743 = vmatprep.mubr.bf16.mxu0 0
        %744 = vmatmul.mubr.bf16.gmra.mrb[0].mxu0 %v480
        %v745 = vpop.f32.mrb[0].mxu0
        %v746 = vadd.f32 0.0, %v745
        %v747 = vpop.f32.mrb[0].mxu0
        %v748 = vadd.f32 0.0, %v747
        %v749 = vpop.f32.mrb[0].mxu0
        %v750 = vadd.f32 0.0, %v749
        %v751 = vpop.f32.mrb[0].mxu0
        %v752 = vadd.f32 0.0, %v751
        %753 = vdwg.mxu0
        %754 = vmatprep.subr.bf16.mxu0 0
        %755 = vmatpush1.bf16.msra.mxu0 %v595
        %756 = vmatprep.subr.bf16.mxu0 0
        %757 = vmatpush1.bf16.msra.mxu0 %v598
        %758 = vmatprep.subr.bf16.mxu0 0
        %759 = vmatpush1.bf16.msra.mxu0 %v601
        %760 = vmatprep.subr.bf16.mxu0 0
        %761 = vmatpush1.bf16.msra.mxu0 %v604
        %762 = vmatprep.subr.bf16.mxu0 0
        %763 = vmatpush1.bf16.msra.mxu0 %v607
        %764 = vmatprep.subr.bf16.mxu0 0
        %765 = vmatpush1.bf16.msra.mxu0 %v610
        %766 = vmatprep.subr.bf16.mxu0 0
        %767 = vmatpush1.bf16.msra.mxu0 %v613
        %768 = vmatprep.subr.bf16.mxu0 0
        %769 = vmatpush1.bf16.msra.mxu0 %v616
        %770 = vmatprep.subr.bf16.mxu0 0
        %771 = vmatpush1.bf16.msra.mxu0 0
        %772 = vmatprep.subr.bf16.mxu0 0
        %773 = vmatpush1.bf16.msra.mxu0 0
        %774 = vmatprep.subr.bf16.mxu0 0
        %775 = vmatpush1.bf16.msra.mxu0 0
        %776 = vmatprep.subr.bf16.mxu0 0
        %777 = vmatpush1.bf16.msra.mxu0 0
        %778 = vmatprep.subr.bf16.mxu0 0
        %779 = vmatpush1.bf16.msra.mxu0 0
        %780 = vmatprep.subr.bf16.mxu0 0
        %781 = vmatpush1.bf16.msra.mxu0 0
        %782 = vmatprep.subr.bf16.mxu0 0
        %783 = vmatpush1.bf16.msra.mxu0 0
        %784 = vmatprep.subr.bf16.mxu0 0
        %785 = vmatpush1.bf16.msra.mxu0 0
        %786 = vmatprep.mubr.bf16.mxu0 0
        %787 = vmatmul.mubr.bf16.gmra.mrb[0].mxu0 %v473
        %v788 = vpop.f32.mrb[0].mxu0
        %v789 = vadd.f32 0.0, %v788
        %v790 = vpop.f32.mrb[0].mxu0
        %v791 = vpop.f32.mrb[0].mxu0
        %v792 = vadd.f32 0.0, %v791
        %v793 = vpop.f32.mrb[0].mxu0
        %794 = vmatprep.mubr.bf16.mxu0 0
        %795 = vmatmul.mubr.bf16.gmra.mrb[0].mxu0 %v474
        %v796 = vpop.f32.mrb[0].mxu0
        %v797 = vadd.f32 0.0, %v796
        %v798 = vpop.f32.mrb[0].mxu0
        %v799 = vpop.f32.mrb[0].mxu0
        %v800 = vadd.f32 0.0, %v799
        %v801 = vpop.f32.mrb[0].mxu0
        %802 = vmatprep.mubr.bf16.mxu0 0
        %803 = vmatmul.mubr.bf16.gmra.mrb[0].mxu0 %v475
        %v804 = vpop.f32.mrb[0].mxu0
        %v805 = vadd.f32 0.0, %v804
        %v806 = vpop.f32.mrb[0].mxu0
        %v807 = vpop.f32.mrb[0].mxu0
        %v808 = vadd.f32 0.0, %v807
        %v809 = vpop.f32.mrb[0].mxu0
        %810 = vmatprep.mubr.bf16.mxu0 0
        %811 = vmatmul.mubr.bf16.gmra.mrb[0].mxu0 %v476
        %v812 = vpop.f32.mrb[0].mxu0
        %v813 = vadd.f32 0.0, %v812
        %v814 = vpop.f32.mrb[0].mxu0
        %v815 = vpop.f32.mrb[0].mxu0
        %v816 = vadd.f32 0.0, %v815
        %v817 = vpop.f32.mrb[0].mxu0
        %818 = vmatprep.mubr.bf16.mxu0 0
        %819 = vmatmul.mubr.bf16.gmra.mrb[0].mxu0 %v477
        %v820 = vpop.f32.mrb[0].mxu0
        %v821 = vadd.f32 0.0, %v820
        %v822 = vpop.f32.mrb[0].mxu0
        %v823 = vpop.f32.mrb[0].mxu0
        %v824 = vadd.f32 0.0, %v823
        %v825 = vpop.f32.mrb[0].mxu0
        %826 = vmatprep.mubr.bf16.mxu0 0
        %827 = vmatmul.mubr.bf16.gmra.mrb[0].mxu0 %v478
        %v828 = vpop.f32.mrb[0].mxu0
        %v829 = vadd.f32 0.0, %v828
        %v830 = vpop.f32.mrb[0].mxu0
        %v831 = vpop.f32.mrb[0].mxu0
        %v832 = vadd.f32 0.0, %v831
        %v833 = vpop.f32.mrb[0].mxu0
        %834 = vmatprep.mubr.bf16.mxu0 0
        %835 = vmatmul.mubr.bf16.gmra.mrb[0].mxu0 %v479
        %v836 = vpop.f32.mrb[0].mxu0
        %v837 = vadd.f32 0.0, %v836
        %v838 = vpop.f32.mrb[0].mxu0
        %v839 = vpop.f32.mrb[0].mxu0
        %v840 = vadd.f32 0.0, %v839
        %v841 = vpop.f32.mrb[0].mxu0
        %842 = vmatprep.mubr.bf16.mxu0 0
        %843 = vmatmul.mubr.bf16.gmra.mrb[0].mxu0 %v480
        %v844 = vpop.f32.mrb[0].mxu0
        %v845 = vadd.f32 0.0, %v844
        %v846 = vpop.f32.mrb[0].mxu0
        %v847 = vpop.f32.mrb[0].mxu0
        %v848 = vadd.f32 0.0, %v847
        %v849 = vpop.f32.mrb[0].mxu0
        %850 = vdwg.mxu0
        %v851 = vpack.c.bf16 %v680, %v676
        %v852 = vpack.c.bf16 %v682, %v678
        %v853 = vpack.c.bf16 %v792, %v789
        %v854 = vpack.c.bf16 %v690, %v686
        %v855 = vpack.c.bf16 %v692, %v688
        %v856 = vpack.c.bf16 %v800, %v797
        %v857 = vpack.c.bf16 %v700, %v696
        %v858 = vpack.c.bf16 %v702, %v698
        %v859 = vpack.c.bf16 %v808, %v805
        %v860 = vpack.c.bf16 %v710, %v706
        %v861 = vpack.c.bf16 %v712, %v708
        %v862 = vpack.c.bf16 %v816, %v813
        %v863 = vpack.c.bf16 %v720, %v716
        %v864 = vpack.c.bf16 %v722, %v718
        %v865 = vpack.c.bf16 %v824, %v821
        %v866 = vpack.c.bf16 %v730, %v726
        %v867 = vpack.c.bf16 %v732, %v728
        %v868 = vpack.c.bf16 %v832, %v829
        %v869 = vpack.c.bf16 %v740, %v736
        %v870 = vpack.c.bf16 %v742, %v738
        %v871 = vpack.c.bf16 %v840, %v837
        %v872 = vpack.c.bf16 %v750, %v746
        %v873 = vpack.c.bf16 %v752, %v748
        %v874 = vpack.c.bf16 %v848, %v845
        %v899 = vunpack.c.l.b16 %v851
        %v900 = vunpack.c.l.b16 %v852
        %v901 = vunpack.c.l.b16 %v853
        %v902 = vunpack.c.h.b16 %v851
        %v903 = vunpack.c.h.b16 %v852
        %v904 = vunpack.c.h.b16 %v853
        %v905 = vunpack.c.l.b16 %v854
        %v906 = vunpack.c.l.b16 %v855
        %v907 = vunpack.c.l.b16 %v856
        %v908 = vunpack.c.h.b16 %v854
        %v909 = vunpack.c.h.b16 %v855
        %v910 = vunpack.c.h.b16 %v856
        %v911 = vunpack.c.l.b16 %v857
        %v912 = vunpack.c.l.b16 %v858
        %v913 = vunpack.c.l.b16 %v859
        %v914 = vunpack.c.h.b16 %v857
        %v915 = vunpack.c.h.b16 %v858
        %v916 = vunpack.c.h.b16 %v859
        %v917 = vunpack.c.l.b16 %v860
        %v918 = vunpack.c.l.b16 %v861
        %v919 = vunpack.c.l.b16 %v862
        %v920 = vunpack.c.h.b16 %v860
        %v921 = vunpack.c.h.b16 %v861
        %v922 = vunpack.c.h.b16 %v862
        %v923 = vunpack.c.l.b16 %v863
        %v924 = vunpack.c.l.b16 %v864
        %v925 = vunpack.c.l.b16 %v865
        %v926 = vunpack.c.h.b16 %v863
        %v927 = vunpack.c.h.b16 %v864
        %v928 = vunpack.c.h.b16 %v865
        %v929 = vunpack.c.l.b16 %v866
        %v930 = vunpack.c.l.b16 %v867
        %v931 = vunpack.c.l.b16 %v868
        %v932 = vunpack.c.h.b16 %v866
        %v933 = vunpack.c.h.b16 %v867
        %v934 = vunpack.c.h.b16 %v868
        %v935 = vunpack.c.l.b16 %v869
        %v936 = vunpack.c.l.b16 %v870
        %v937 = vunpack.c.l.b16 %v871
        %v938 = vunpack.c.h.b16 %v869
        %v939 = vunpack.c.h.b16 %v870
        %v940 = vunpack.c.h.b16 %v871
        %v941 = vunpack.c.l.b16 %v872
        %v942 = vunpack.c.l.b16 %v873
        %v943 = vunpack.c.l.b16 %v874
        %v944 = vunpack.c.h.b16 %v872
        %v945 = vunpack.c.h.b16 %v873
        %v946 = vunpack.c.h.b16 %v874
        %v947 = vpack.c.b16 %v900, %v899
        %v948 = vpack.c.b16 %v901, %v901
        %v949 = vpack.c.b16 %v903, %v902
        %v950 = vpack.c.b16 %v904, %v904
        %v951 = vpack.c.b16 %v906, %v905
        %v952 = vpack.c.b16 %v907, %v907
        %v953 = vpack.c.b16 %v909, %v908
        %v954 = vpack.c.b16 %v910, %v910
        %v955 = vpack.c.b16 %v912, %v911
        %v956 = vpack.c.b16 %v913, %v913
        %v957 = vpack.c.b16 %v915, %v914
        %v958 = vpack.c.b16 %v916, %v916
        %v959 = vpack.c.b16 %v918, %v917
        %v960 = vpack.c.b16 %v919, %v919
        %v961 = vpack.c.b16 %v921, %v920
        %v962 = vpack.c.b16 %v922, %v922
        %v963 = vpack.c.b16 %v924, %v923
        %v964 = vpack.c.b16 %v925, %v925
        %v965 = vpack.c.b16 %v927, %v926
        %v966 = vpack.c.b16 %v928, %v928
        %v967 = vpack.c.b16 %v930, %v929
        %v968 = vpack.c.b16 %v931, %v931
        %v969 = vpack.c.b16 %v933, %v932
        %v970 = vpack.c.b16 %v934, %v934
        %v971 = vpack.c.b16 %v936, %v935
        %v972 = vpack.c.b16 %v937, %v937
        %v973 = vpack.c.b16 %v939, %v938
        %v974 = vpack.c.b16 %v940, %v940
        %v975 = vpack.c.b16 %v942, %v941
        %v976 = vpack.c.b16 %v943, %v943
        %v977 = vpack.c.b16 %v945, %v944
        %v978 = vpack.c.b16 %v946, %v946
        %1011 = vst [vmem:[%s230] sm:$0xff] %v947
        %1012 = vst [vmem:[%s230 + $0x8] sm:$0xf] %v948
        %1013 = vst [vmem:[%s230 + $0xc] sm:$0xff] %v949
        %1014 = vst [vmem:[%s230 + $0x14] sm:$0xf] %v950
        %1015 = vst [vmem:[%s230 + $0x18] sm:$0xff] %v951
        %1016 = vst [vmem:[%s230 + $0x20] sm:$0xf] %v952
        %1017 = vst [vmem:[%s230 + $0x24] sm:$0xff] %v953
        %1018 = vst [vmem:[%s230 + $0x2c] sm:$0xf] %v954
        %1019 = vst [vmem:[%s230 + $0x30] sm:$0xff] %v955
        %1020 = vst [vmem:[%s230 + $0x38] sm:$0xf] %v956
        %1021 = vst [vmem:[%s230 + $0x3c] sm:$0xff] %v957
        %1022 = vst [vmem:[%s230 + $0x44] sm:$0xf] %v958
        %1023 = vst [vmem:[%s230 + $0x48] sm:$0xff] %v959
        %1024 = vst [vmem:[%s230 + $0x50] sm:$0xf] %v960
        %1025 = vst [vmem:[%s230 + $0x54] sm:$0xff] %v961
        %1026 = vst [vmem:[%s230 + $0x5c] sm:$0xf] %v962
        %1027 = vst [vmem:[%s230 + $0x60] sm:$0xff] %v963
        %1028 = vst [vmem:[%s230 + $0x68] sm:$0xf] %v964
        %1029 = vst [vmem:[%s230 + $0x6c] sm:$0xff] %v965
        %1030 = vst [vmem:[%s230 + $0x74] sm:$0xf] %v966
        %1031 = vst [vmem:[%s230 + $0x78] sm:$0xff] %v967
        %1032 = vst [vmem:[%s230 + $0x80] sm:$0xf] %v968
        %1033 = vst [vmem:[%s230 + $0x84] sm:$0xff] %v969
        %1034 = vst [vmem:[%s230 + $0x8c] sm:$0xf] %v970
        %1035 = vst [vmem:[%s230 + $0x90] sm:$0xff] %v971
        %1036 = vst [vmem:[%s230 + $0x98] sm:$0xf] %v972
        %1037 = vst [vmem:[%s230 + $0x9c] sm:$0xff] %v973
        %1038 = vst [vmem:[%s230 + $0xa4] sm:$0xf] %v974
        %1039 = vst [vmem:[%s230 + $0xa8] sm:$0xff] %v975
        %1040 = vst [vmem:[%s230 + $0xb0] sm:$0xf] %v976
        %1041 = vst [vmem:[%s230 + $0xb4] sm:$0xff] %v977
        %1042 = vst [vmem:[%s230 + $0xbc] sm:$0xf] %v978
        %s1043 = sand.u32 %s119, 1
        %s1044 = scalar_lea.sflag [#allocation4], %s1043
        %s1045 = sand.u32 %s119, 1
        %s1046 = smul.addr %s1045, 192
        %s1047 = scalar_lea.vmem [#allocation7], %s1046
        // Predicated region
        $region45: #{tpu_custom_call.1} parent=35 // pred_check
          %p1048 = pneg %p129
        $region46: #{tpu_custom_call.1} parent=35 // pred_check_branch
          %1050 = sbr.rel (%p1048) target = $region48
        $region47: #{tpu_custom_call.1} parent=35 // pred_region
          %s1051 = smul.u32 16, %s22
          %s1053 = ssub.s32 3072, 3072
          %1054 = vsyncadd %s1044, %s1053
          %s1055 = smul.addr %s1051, 3
          %s1056 = smul.addr %s1055, 64
          %s1057 = scalar_lea.hbm %s4, %s1056
          %s1058 = sshll.u32 %s1047, 4
          %s1059 = int_to_ptr.vmem [resolvable:$true] %s1058
          %1064 = dma.vmem_to_hbm [thread:$0]  %s1059, 3072, %s1057, %s1044, 192, 192, 12
        $region48: #{tpu_custom_call.1} parent=35 // pred_fallthru
          _
      $region36: #{tpu_custom_call.1} parent=5 // pred_fallthru
        _
      %p1065 = scmp.le.s32.totalorder 2, %s17
      // Predicated region
      $region49: #{tpu_custom_call.1} parent=5 // pred_check
        %p1066 = pneg %p1065
      $region50: #{tpu_custom_call.1} parent=5 // pred_check_branch
        %1068 = sbr.rel (%p1066) target = $region52
      $region51: #{tpu_custom_call.1} parent=5 // pred_region
        %s1069 = ssub.s32 %s17, 2
        // Predicated region
        $region53: #{tpu_custom_call.1} parent=51 // pred_check
          %p1070 = pneg %p135
        $region54: #{tpu_custom_call.1} parent=51 // pred_check_branch
          %1072 = sbr.rel (%p1070) target = $region56
        $region55: #{tpu_custom_call.1} parent=51 // pred_region
          %s1073 = sand.u32 %s120, 1
          %s1074 = scalar_lea.sflag [#allocation4], %s1073
          %s1075 = sand.u32 %s120, 1
          %s1076 = smul.addr %s1075, 192
          %s1077 = scalar_lea.vmem [#allocation7], %s1076
          %1078 = dma.done %s1074, 3072
        $region56: #{tpu_custom_call.1} parent=51 // pred_fallthru
          _
      $region52: #{tpu_custom_call.1} parent=5 // pred_fallthru
        _
    $region6: #{tpu_custom_call.1} parent=1 // loop_footer
      %s21 = sadd.s32 1, %s17
    $region7: #{tpu_custom_call.1} parent=1 // loop_footer_branch
      %16 = sbr.rel target = $region3
    $region8: #{tpu_custom_call.1} parent=1 // loop_exit
      _
    %1079 = vsyncpa [#allocation3], 1
    %s1080 = scalar_lea.sflag [#allocation3], 1
    %1081 = vsyncpa %s1080, 1
    %1082 = vsyncpa [#allocation6], 1
    %1083 = vsyncpa [#allocation4], 1
    %s1084 = scalar_lea.sflag [#allocation4], 1
    %1085 = vsyncpa %s1084, 1

</llo_original>
